<compile_context>
chip_gen: v5e
topology: v5e:2x2
jax: 0.10.0
libtpu: 0.0.40
codegen_flags: <defaults>
</compile_context>

<pallas_src>
import functools

import jax
import jax.numpy as jnp
from jax import lax
from jax.experimental import pallas as pl
from jax.experimental.pallas import tpu as pltpu


def _session_rnn_kernel(tok_ref, emb_ref, w_ih_ref, b_ref, w_hh_ref,
                        w_out_ref, b_out_ref, o_ref, *, T, B):
    """Fully fused SessionRNN forward.

    tok_ref:   (T*B, 1) int32, time-major flattened token ids
    emb_ref:   (V, H)   embedding table
    w_ih_ref:  (H, H)   input weights, stored so the kernel does  x @ W_ih
    b_ref:     (1, H)   b_ih + b_hh
    w_hh_ref:  (H, H)   recurrent weights, stored so the kernel does  h @ W_hh
    w_out_ref: (H, O)   output weights, stored so the kernel does  h @ W_out
    b_out_ref: (1, O)
    o_ref:     (B, O)
    """
    V, H = emb_ref.shape

    # (1) Non-recurrent half of the FLOPs hoisted out of the time loop:
    #     project the whole embedding table once, fold in the biases.
    proj = (jnp.dot(emb_ref[...], w_ih_ref[...],
                    preferred_element_type=jnp.float32)
            + b_ref[...])                                      # (V, H) f32

    # (2) Fused gather: one-hot (T*B, V) @ proj (V, H) -> time-major (T*B, H).
    #     Exact (rows of proj), one MXU push, no HBM slab round-trip.
    #     NOTE: for large vocabularies replace with a scalar-prefetch /
    #     DMA-gather path; at V=64 the one-hot matmul is cheapest.
    tok = tok_ref[...]                                         # (T*B, 1) int32
    onehot = (tok == lax.broadcasted_iota(jnp.int32, (T * B, V), 1)
              ).astype(jnp.float32)                            # (T*B, V)
    xproj = jnp.dot(onehot, proj,
                    preferred_element_type=jnp.float32)        # (T*B, H)

    # (3) Serial recurrence, fully unrolled (T small & static): one MXU push
    #     per step plus VPU add + EUP tanh, all f32.
    w_hh = w_hh_ref[...]                                       # (H, H)
    h = jnp.zeros((B, H), jnp.float32)
    for t in range(T):
        x_t = xproj[t * B:(t + 1) * B, :]                      # static slice
        h = jnp.tanh(x_t + jnp.dot(h, w_hh,
                                   preferred_element_type=jnp.float32))

    # (4) Output Linear on the final hidden state only (== output[:, -1, :]).
    o_ref[...] = (jnp.dot(h, w_out_ref[...],
                          preferred_element_type=jnp.float32)
                  + b_out_ref[...]).astype(o_ref.dtype)


def session_rnn_forward(tokens, params):
    """tokens: (B, T) int32.  Returns (B, output_size) float32."""
    emb = params["embedding"]      # (V, H)
    w_ih = params["w_ih"]          # (H, H)   pre-transposed: x @ w_ih
    w_hh = params["w_hh"]          # (H, H)   pre-transposed: h @ w_hh
    b = params["b"]                # (1, H)   b_ih + b_hh
    w_out = params["w_out"]        # (H, O)   pre-transposed
    b_out = params["b_out"]        # (1, O)

    B, T = tokens.shape
    V, H = emb.shape
    O = w_out.shape[1]

    # Only remaining wrapper work: lay the tiny token tensor out time-major so
    # each per-step slice inside the kernel is contiguous.
    tok_tm = tokens.T.reshape(T * B, 1).astype(jnp.int32)

    flops = (2 * V * H * H          # embedding-table projection
             + 2 * T * B * V * H    # one-hot gather matmul
             + 2 * T * B * H * H    # recurrence
             + 2 * B * H * O)       # output linear
    transcendentals = T * B * H     # tanh
    bytes_accessed = 4 * (T * B + V * H + 2 * H * H + H + H * O + O + B * O)

    vmem = pltpu.MemorySpace.VMEM
    kernel = functools.partial(_session_rnn_kernel, T=T, B=B)
    out = pl.pallas_call(
        kernel,
        out_shape=jax.ShapeDtypeStruct((B, O), jnp.float32),
        in_specs=[
            pl.BlockSpec(memory_space=vmem),   # tokens   (T*B, 1) int32
            pl.BlockSpec(memory_space=vmem),   # emb      (V, H)
            pl.BlockSpec(memory_space=vmem),   # W_ih     (H, H)
            pl.BlockSpec(memory_space=vmem),   # b        (1, H)
            pl.BlockSpec(memory_space=vmem),   # W_hh     (H, H)
            pl.BlockSpec(memory_space=vmem),   # W_out    (H, O)
            pl.BlockSpec(memory_space=vmem),   # b_out    (1, O)
        ],
        out_specs=pl.BlockSpec(memory_space=vmem),
        cost_estimate=pl.CostEstimate(flops=flops,
                                      transcendentals=transcendentals,
                                      bytes_accessed=bytes_accessed),
    )(tok_tm, emb, w_ih, b, w_hh, w_out, b_out)
    return out


def init_params(key, input_size, hidden_size, output_size):
    """Deterministic synthetic params matching nn.Embedding / nn.RNN / nn.Linear shapes."""
    ks = jax.random.split(key, 7)
    H = hidden_size
    bound = 1.0 / jnp.sqrt(jnp.float32(H))
    emb = jax.random.normal(ks[0], (input_size, H), jnp.float32)          # N(0,1) like nn.Embedding
    w_ih = jax.random.uniform(ks[1], (H, H), jnp.float32, -bound, bound)  # torch (H_out, H_in)
    w_hh = jax.random.uniform(ks[2], (H, H), jnp.float32, -bound, bound)
    b_ih = jax.random.uniform(ks[3], (H,), jnp.float32, -bound, bound)
    b_hh = jax.random.uniform(ks[4], (H,), jnp.float32, -bound, bound)
    w_out = jax.random.uniform(ks[5], (output_size, H), jnp.float32, -bound, bound)
    b_out = jax.random.uniform(ks[6], (output_size,), jnp.float32, -bound, bound)
    return {
        "embedding": emb,
        "w_ih": w_ih.T,                       # store as (H_in, H_out): kernel does x @ W
        "w_hh": w_hh.T,
        "b": (b_ih + b_hh).reshape(1, H),
        "w_out": w_out.T,                     # (H, O)
        "b_out": b_out.reshape(1, output_size),
    }


def _reference_forward(tokens, params):
    """Pure-JAX reference matching the PyTorch forward (per-step x @ W_ih)."""
    hi = jax.lax.Precision.HIGHEST
    emb = jnp.take(params["embedding"], tokens, axis=0)   # (B, T, H)
    B, T, H = emb.shape
    h = jnp.zeros((B, H), jnp.float32)
    for t in range(T):
        h = jnp.tanh(jnp.dot(emb[:, t, :], params["w_ih"], precision=hi)
                     + jnp.dot(h, params["w_hh"], precision=hi)
                     + params["b"])
    return jnp.dot(h, params["w_out"], precision=hi) + params["b_out"]


if __name__ == "__main__":
    input_size = 64     # vocab size
    hidden_size = 32
    output_size = 16
    B, T = 8, 8

    key = jax.random.PRNGKey(0)
    k_tok, k_param = jax.random.split(key)
    tokens = jax.random.randint(k_tok, (B, T), 0, input_size, dtype=jnp.int32)
    params = init_params(k_param, input_size, hidden_size, output_size)

    out = session_rnn_forward(tokens, params)
    out = jax.block_until_ready(out)

    ref = _reference_forward(tokens, params)
    assert out.shape == (B, output_size)
    assert jnp.allclose(out, ref, atol=1e-4, rtol=1e-4), "mismatch vs reference"

    print("KERNEL_OK")
</pallas_src>

<mosaic_0001>
module attributes {stable_mosaic.version = 11 : i64} {
  func.func @_session_rnn_kernel(%arg0: memref<64x1xi32, #tpu.memory_space<vmem>>, %arg1: memref<64x32xf32, #tpu.memory_space<vmem>>, %arg2: memref<32x32xf32, #tpu.memory_space<vmem>>, %arg3: memref<1x32xf32, #tpu.memory_space<vmem>>, %arg4: memref<32x32xf32, #tpu.memory_space<vmem>>, %arg5: memref<32x16xf32, #tpu.memory_space<vmem>>, %arg6: memref<1x16xf32, #tpu.memory_space<vmem>>, %arg7: memref<8x16xf32, #tpu.memory_space<vmem>>) attributes {dimension_semantics = [], scalar_prefetch = 0 : i64, scratch_operands = 0 : i64, tpu.core_type = #tpu.core_type<tc>} {
    %c0 = arith.constant 0 : index
    %c0_0 = arith.constant 0 : index
    %0 = vector.load %arg1[%c0, %c0_0] : memref<64x32xf32, #tpu.memory_space<vmem>>, vector<64x32xf32>
    %c0_1 = arith.constant 0 : index
    %c0_2 = arith.constant 0 : index
    %1 = vector.load %arg2[%c0_1, %c0_2] : memref<32x32xf32, #tpu.memory_space<vmem>>, vector<32x32xf32>
    %cst = arith.constant dense<0.000000e+00> : vector<64x32xf32>
    %2 = tpu.matmul %0, %1, %cst {dimension_numbers = #tpu.dot_dimension_numbers<[1], [0], [0], [1], [0, 0, 1, 1], [], []>} : vector<64x32xf32>, vector<32x32xf32>, vector<64x32xf32> -> vector<64x32xf32>
    %c0_3 = arith.constant 0 : index
    %c0_4 = arith.constant 0 : index
    %3 = vector.load %arg3[%c0_3, %c0_4] : memref<1x32xf32, #tpu.memory_space<vmem>>, vector<1x32xf32>
    %4 = vector.broadcast %3 : vector<1x32xf32> to vector<64x32xf32>
    %5 = arith.addf %2, %4 : vector<64x32xf32>
    %c0_5 = arith.constant 0 : index
    %c0_6 = arith.constant 0 : index
    %6 = vector.load %arg0[%c0_5, %c0_6] : memref<64x1xi32, #tpu.memory_space<vmem>>, vector<64x1xi32>
    %7 = tpu.iota {dimensions = array<i32: 1>} : vector<64x64xi32>
    %8 = vector.broadcast %6 : vector<64x1xi32> to vector<64x64xi32>
    %9 = arith.cmpi eq, %8, %7 : vector<64x64xi32>
    %10 = arith.extui %9 : vector<64x64xi1> to vector<64x64xi32>
    %11 = arith.sitofp %10 : vector<64x64xi32> to vector<64x64xf32>
    %cst_7 = arith.constant dense<0.000000e+00> : vector<64x32xf32>
    %12 = tpu.matmul %11, %5, %cst_7 {dimension_numbers = #tpu.dot_dimension_numbers<[1], [0], [0], [1], [0, 0, 1, 1], [], []>} : vector<64x64xf32>, vector<64x32xf32>, vector<64x32xf32> -> vector<64x32xf32>
    %c0_8 = arith.constant 0 : index
    %c0_9 = arith.constant 0 : index
    %13 = vector.load %arg4[%c0_8, %c0_9] : memref<32x32xf32, #tpu.memory_space<vmem>>, vector<32x32xf32>
    %cst_10 = arith.constant 0.000000e+00 : f32
    %14 = vector.broadcast %cst_10 : f32 to vector<8x32xf32>
    %15 = vector.extract_strided_slice %12 {offsets = [0, 0], sizes = [8, 32], strides = [1, 1]} : vector<64x32xf32> to vector<8x32xf32>
    %cst_11 = arith.constant dense<0.000000e+00> : vector<8x32xf32>
    %16 = tpu.matmul %14, %13, %cst_11 {dimension_numbers = #tpu.dot_dimension_numbers<[1], [0], [0], [1], [0, 0, 1, 1], [], []>} : vector<8x32xf32>, vector<32x32xf32>, vector<8x32xf32> -> vector<8x32xf32>
    %17 = arith.addf %15, %16 : vector<8x32xf32>
    %18 = math.tanh %17 : vector<8x32xf32>
    %19 = vector.extract_strided_slice %12 {offsets = [8, 0], sizes = [8, 32], strides = [1, 1]} : vector<64x32xf32> to vector<8x32xf32>
    %cst_12 = arith.constant dense<0.000000e+00> : vector<8x32xf32>
    %20 = tpu.matmul %18, %13, %cst_12 {dimension_numbers = #tpu.dot_dimension_numbers<[1], [0], [0], [1], [0, 0, 1, 1], [], []>} : vector<8x32xf32>, vector<32x32xf32>, vector<8x32xf32> -> vector<8x32xf32>
    %21 = arith.addf %19, %20 : vector<8x32xf32>
    %22 = math.tanh %21 : vector<8x32xf32>
    %23 = vector.extract_strided_slice %12 {offsets = [16, 0], sizes = [8, 32], strides = [1, 1]} : vector<64x32xf32> to vector<8x32xf32>
    %cst_13 = arith.constant dense<0.000000e+00> : vector<8x32xf32>
    %24 = tpu.matmul %22, %13, %cst_13 {dimension_numbers = #tpu.dot_dimension_numbers<[1], [0], [0], [1], [0, 0, 1, 1], [], []>} : vector<8x32xf32>, vector<32x32xf32>, vector<8x32xf32> -> vector<8x32xf32>
    %25 = arith.addf %23, %24 : vector<8x32xf32>
    %26 = math.tanh %25 : vector<8x32xf32>
    %27 = vector.extract_strided_slice %12 {offsets = [24, 0], sizes = [8, 32], strides = [1, 1]} : vector<64x32xf32> to vector<8x32xf32>
    %cst_14 = arith.constant dense<0.000000e+00> : vector<8x32xf32>
    %28 = tpu.matmul %26, %13, %cst_14 {dimension_numbers = #tpu.dot_dimension_numbers<[1], [0], [0], [1], [0, 0, 1, 1], [], []>} : vector<8x32xf32>, vector<32x32xf32>, vector<8x32xf32> -> vector<8x32xf32>
    %29 = arith.addf %27, %28 : vector<8x32xf32>
    %30 = math.tanh %29 : vector<8x32xf32>
    %31 = vector.extract_strided_slice %12 {offsets = [32, 0], sizes = [8, 32], strides = [1, 1]} : vector<64x32xf32> to vector<8x32xf32>
    %cst_15 = arith.constant dense<0.000000e+00> : vector<8x32xf32>
    %32 = tpu.matmul %30, %13, %cst_15 {dimension_numbers = #tpu.dot_dimension_numbers<[1], [0], [0], [1], [0, 0, 1, 1], [], []>} : vector<8x32xf32>, vector<32x32xf32>, vector<8x32xf32> -> vector<8x32xf32>
    %33 = arith.addf %31, %32 : vector<8x32xf32>
    %34 = math.tanh %33 : vector<8x32xf32>
    %35 = vector.extract_strided_slice %12 {offsets = [40, 0], sizes = [8, 32], strides = [1, 1]} : vector<64x32xf32> to vector<8x32xf32>
    %cst_16 = arith.constant dense<0.000000e+00> : vector<8x32xf32>
    %36 = tpu.matmul %34, %13, %cst_16 {dimension_numbers = #tpu.dot_dimension_numbers<[1], [0], [0], [1], [0, 0, 1, 1], [], []>} : vector<8x32xf32>, vector<32x32xf32>, vector<8x32xf32> -> vector<8x32xf32>
    %37 = arith.addf %35, %36 : vector<8x32xf32>
    %38 = math.tanh %37 : vector<8x32xf32>
    %39 = vector.extract_strided_slice %12 {offsets = [48, 0], sizes = [8, 32], strides = [1, 1]} : vector<64x32xf32> to vector<8x32xf32>
    %cst_17 = arith.constant dense<0.000000e+00> : vector<8x32xf32>
    %40 = tpu.matmul %38, %13, %cst_17 {dimension_numbers = #tpu.dot_dimension_numbers<[1], [0], [0], [1], [0, 0, 1, 1], [], []>} : vector<8x32xf32>, vector<32x32xf32>, vector<8x32xf32> -> vector<8x32xf32>
    %41 = arith.addf %39, %40 : vector<8x32xf32>
    %42 = math.tanh %41 : vector<8x32xf32>
    %43 = vector.extract_strided_slice %12 {offsets = [56, 0], sizes = [8, 32], strides = [1, 1]} : vector<64x32xf32> to vector<8x32xf32>
    %cst_18 = arith.constant dense<0.000000e+00> : vector<8x32xf32>
    %44 = tpu.matmul %42, %13, %cst_18 {dimension_numbers = #tpu.dot_dimension_numbers<[1], [0], [0], [1], [0, 0, 1, 1], [], []>} : vector<8x32xf32>, vector<32x32xf32>, vector<8x32xf32> -> vector<8x32xf32>
    %45 = arith.addf %43, %44 : vector<8x32xf32>
    %46 = math.tanh %45 : vector<8x32xf32>
    %c0_19 = arith.constant 0 : index
    %c0_20 = arith.constant 0 : index
    %47 = vector.load %arg5[%c0_19, %c0_20] : memref<32x16xf32, #tpu.memory_space<vmem>>, vector<32x16xf32>
    %cst_21 = arith.constant dense<0.000000e+00> : vector<8x16xf32>
    %48 = tpu.matmul %46, %47, %cst_21 {dimension_numbers = #tpu.dot_dimension_numbers<[1], [0], [0], [1], [0, 0, 1, 1], [], []>} : vector<8x32xf32>, vector<32x16xf32>, vector<8x16xf32> -> vector<8x16xf32>
    %c0_22 = arith.constant 0 : index
    %c0_23 = arith.constant 0 : index
    %49 = vector.load %arg6[%c0_22, %c0_23] : memref<1x16xf32, #tpu.memory_space<vmem>>, vector<1x16xf32>
    %50 = vector.broadcast %49 : vector<1x16xf32> to vector<8x16xf32>
    %51 = arith.addf %48, %50 : vector<8x16xf32>
    %c0_24 = arith.constant 0 : index
    %c0_25 = arith.constant 0 : index
    %52 = vector.load %arg7[%c0_24, %c0_25] : memref<8x16xf32, #tpu.memory_space<vmem>>, vector<8x16xf32>
    tpu.vector_store %arg7[%c0_24, %c0_25], %51 {strides = array<i32>} : memref<8x16xf32, #tpu.memory_space<vmem>>, vector<8x16xf32>,
    return
  }
}

</mosaic_0001>

<llo_original>
// kernel: tpu_custom_call.1
$region0: #{tpu_custom_call.1}
  #allocation0 [shape = 'u32[]', space=smem, size = 0x4, offset = 0x4, fixed_abs, tag = 'smem constant byte address 0x4 - core index']
  #allocation1 [shape = 'u32[72,128]{1,0:T(1,128)}', space=vmem, size = 0x9000, scoped, tag = 'internal scratch']
  %s0 = inlined_call_operand.vmem [shape: s32[64,1], index: 0, kind: input, shape index: {}]
  %s1 = inlined_call_operand.vmem [shape: f32[64,32], index: 1, kind: input, shape index: {}]
  %s2 = inlined_call_operand.vmem [shape: f32[32,32], index: 2, kind: input, shape index: {}]
  %s3 = inlined_call_operand.vmem [shape: f32[1,32], index: 3, kind: input, shape index: {}]
  %s4 = inlined_call_operand.vmem [shape: f32[32,32], index: 4, kind: input, shape index: {}]
  %s5 = inlined_call_operand.vmem [shape: f32[32,16], index: 5, kind: input, shape index: {}]
  %s6 = inlined_call_operand.vmem [shape: f32[1,16], index: 6, kind: input, shape index: {}]
  %s7 = inlined_call_operand.hbm [shape: f32[8,16], index: 7, kind: output, shape index: {}]
  %s8 = sld [smem:[#allocation0]]
  $region38: #{tpu_custom_call.1} parent=0
    _
  %s10 = ssub.s32 1, %s8
  %s11 = scalar_select 0, %s10, %s8
  $region1: #{tpu_custom_call.1} parent=0
    #allocation2 [shape = 'u8[4096]{0}', space=vmem, size = 0x1000, scoped, tag = 'output window, operand 0, single buffered']
    #allocation3 [shape = 's32[1]{0}', space=sflag, size = 0x4, scoped, tag = 'scoped memory for tpu_custom_call.1']
    %12 = vsyncpa [#allocation3], 0
    // Predicated region
    $region2: #{tpu_custom_call.1} parent=1 // pred_check
      _
    $region3: #{tpu_custom_call.1} parent=1 // pred_check_branch
      %14 = sbr.rel (0) target = $region5
    $region4: #{tpu_custom_call.1} parent=1 // pred_region
      _
    $region5: #{tpu_custom_call.1} parent=1 // pred_fallthru
      _
    // Predicated region
    $region6: #{tpu_custom_call.1} parent=1 // pred_check
      _
    $region7: #{tpu_custom_call.1} parent=1 // pred_check_branch
      %16 = sbr.rel (0) target = $region9
    $region8: #{tpu_custom_call.1} parent=1 // pred_region
      _
    $region9: #{tpu_custom_call.1} parent=1 // pred_fallthru
      _
    // Predicated region
    $region10: #{tpu_custom_call.1} parent=1 // pred_check
      _
    $region11: #{tpu_custom_call.1} parent=1 // pred_check_branch
      %18 = sbr.rel (0) target = $region13
    $region12: #{tpu_custom_call.1} parent=1 // pred_region
      _
    $region13: #{tpu_custom_call.1} parent=1 // pred_fallthru
      _
    // Predicated region
    $region14: #{tpu_custom_call.1} parent=1 // pred_check
      _
    $region15: #{tpu_custom_call.1} parent=1 // pred_check_branch
      %20 = sbr.rel (0) target = $region17
    $region16: #{tpu_custom_call.1} parent=1 // pred_region
      _
    $region17: #{tpu_custom_call.1} parent=1 // pred_fallthru
      _
    // Predicated region
    $region18: #{tpu_custom_call.1} parent=1 // pred_check
      _
    $region19: #{tpu_custom_call.1} parent=1 // pred_check_branch
      %22 = sbr.rel (0) target = $region21
    $region20: #{tpu_custom_call.1} parent=1 // pred_region
      _
    $region21: #{tpu_custom_call.1} parent=1 // pred_fallthru
      _
    // Predicated region
    $region22: #{tpu_custom_call.1} parent=1 // pred_check
      _
    $region23: #{tpu_custom_call.1} parent=1 // pred_check_branch
      %24 = sbr.rel (0) target = $region25
    $region24: #{tpu_custom_call.1} parent=1 // pred_region
      _
    $region25: #{tpu_custom_call.1} parent=1 // pred_fallthru
      _
    // Predicated region
    $region26: #{tpu_custom_call.1} parent=1 // pred_check
      _
    $region27: #{tpu_custom_call.1} parent=1 // pred_check_branch
      %26 = sbr.rel (0) target = $region29
    $region28: #{tpu_custom_call.1} parent=1 // pred_region
      _
    $region29: #{tpu_custom_call.1} parent=1 // pred_fallthru
      _
    %v27 = vld [vmem:[%s1] sm:$0xff]
    %v28 = vld [vmem:[%s1 + $0x8] sm:$0xff]
    %v29 = vld [vmem:[%s1 + $0x10] sm:$0xff]
    %v30 = vld [vmem:[%s1 + $0x18] sm:$0xff]
    %v31 = vld [vmem:[%s1 + $0x20] sm:$0xff]
    %v32 = vld [vmem:[%s1 + $0x28] sm:$0xff]
    %v33 = vld [vmem:[%s1 + $0x30] sm:$0xff]
    %v34 = vld [vmem:[%s1 + $0x38] sm:$0xff]
    %v35 = vld [vmem:[%s2] sm:$0xff]
    %v36 = vld [vmem:[%s2 + $0x8] sm:$0xff]
    %v37 = vld [vmem:[%s2 + $0x10] sm:$0xff]
    %v38 = vld [vmem:[%s2 + $0x18] sm:$0xff]
    %v39 = vld [vmem:[%s3] sm:$0x1]
    %v41 = vperm.slane %v39, 0
    %vm43 = vcmask 261120
    %v45 = vsel %vm43, %v27, 0
    %v48 = vsel %vm43, %v28, 0
    %v51 = vsel %vm43, %v29, 0
    %v54 = vsel %vm43, %v30, 0
    %v57 = vsel %vm43, %v31, 0
    %v60 = vsel %vm43, %v32, 0
    %v63 = vsel %vm43, %v33, 0
    %v66 = vsel %vm43, %v34, 0
    %68 = vmatpush.msra.mxu0 0.0
    %69 = vmatpush.msra.mxu0 0.0
    %70 = vmatpush.msra.mxu0 0.0
    %71 = vmatpush.msra.mxu0 0.0
    %72 = vmatpush.msra.mxu0 0.0
    %73 = vmatpush.msra.mxu0 0.0
    %74 = vmatpush.msra.mxu0 0.0
    %75 = vmatpush.msra.mxu0 0.0
    %76 = vmatpush.msra.mxu0 0.0
    %77 = vmatpush.msra.mxu0 0.0
    %78 = vmatpush.msra.mxu0 0.0
    %79 = vmatpush.msra.mxu0 0.0
    %80 = vmatpush.msra.mxu0 %v38
    %81 = vmatpush.msra.mxu0 %v37
    %82 = vmatpush.msra.mxu0 %v36
    %83 = vmatpush.msra.mxu0 %v35
    %84 = vmatmul.f32.gmra.mxu0 %v45
    %v85 = vpop.f32.mrf.mxu0
    %v86 = vadd.f32 %v41, %v85
    %87 = vmatmul.f32.gmra.mxu0 %v48
    %v88 = vpop.f32.mrf.mxu0
    %v89 = vadd.f32 %v41, %v88
    %90 = vmatmul.f32.gmra.mxu0 %v51
    %v91 = vpop.f32.mrf.mxu0
    %v92 = vadd.f32 %v41, %v91
    %93 = vmatmul.f32.gmra.mxu0 %v54
    %v94 = vpop.f32.mrf.mxu0
    %v95 = vadd.f32 %v41, %v94
    %96 = vmatmul.f32.gmra.mxu0 %v57
    %v97 = vpop.f32.mrf.mxu0
    %v98 = vadd.f32 %v41, %v97
    %99 = vmatmul.f32.gmra.mxu0 %v60
    %v100 = vpop.f32.mrf.mxu0
    %v101 = vadd.f32 %v41, %v100
    %102 = vmatmul.f32.gmra.mxu0 %v63
    %v103 = vpop.f32.mrf.mxu0
    %v104 = vadd.f32 %v41, %v103
    %105 = vmatmul.f32.gmra.mxu0 %v66
    %v106 = vpop.f32.mrf.mxu0
    %v107 = vadd.f32 %v41, %v106
    %108 = vdwg.mxu0
    %v109 = vld [vmem:[%s0] sm:$0xff]
    %v110 = vld [vmem:[%s0 + $0x8] sm:$0xff]
    %v111 = vld [vmem:[%s0 + $0x10] sm:$0xff]
    %v112 = vld [vmem:[%s0 + $0x18] sm:$0xff]
    %v113 = vld [vmem:[%s0 + $0x20] sm:$0xff]
    %v114 = vld [vmem:[%s0 + $0x28] sm:$0xff]
    %v115 = vld [vmem:[%s0 + $0x30] sm:$0xff]
    %v116 = vld [vmem:[%s0 + $0x38] sm:$0xff]
    %v117 = vlaneseq
    %v118 = vand.u32 %v117, 127
    %119 = vset.pattern.permute.xlu0 0
    %120 = vperm.xlu0 %119, %v109
    %v121 = vpop.permute.xlu0 %120
    %122 = vset.pattern.permute.xlu0 0
    %123 = vperm.xlu0 %122, %v110
    %v124 = vpop.permute.xlu0 %123
    %125 = vset.pattern.permute.xlu0 0
    %126 = vperm.xlu0 %125, %v111
    %v127 = vpop.permute.xlu0 %126
    %128 = vset.pattern.permute.xlu0 0
    %129 = vperm.xlu0 %128, %v112
    %v130 = vpop.permute.xlu0 %129
    %131 = vset.pattern.permute.xlu0 0
    %132 = vperm.xlu0 %131, %v113
    %v133 = vpop.permute.xlu0 %132
    %134 = vset.pattern.permute.xlu0 0
    %135 = vperm.xlu0 %134, %v114
    %v136 = vpop.permute.xlu0 %135
    %137 = vset.pattern.permute.xlu0 0
    %138 = vperm.xlu0 %137, %v115
    %v139 = vpop.permute.xlu0 %138
    %140 = vset.pattern.permute.xlu0 0
    %141 = vperm.xlu0 %140, %v116
    %v142 = vpop.permute.xlu0 %141
    %vm143 = vcmp.eq.s32.totalorder %v121, %v118
    %vm144 = vcmp.eq.s32.totalorder %v124, %v118
    %vm145 = vcmp.eq.s32.totalorder %v127, %v118
    %vm146 = vcmp.eq.s32.totalorder %v130, %v118
    %vm147 = vcmp.eq.s32.totalorder %v133, %v118
    %vm148 = vcmp.eq.s32.totalorder %v136, %v118
    %vm149 = vcmp.eq.s32.totalorder %v139, %v118
    %vm150 = vcmp.eq.s32.totalorder %v142, %v118
    %v151 = vsel %vm143, 1, 0
    %v152 = vsel %vm144, 1, 0
    %v153 = vsel %vm145, 1, 0
    %v154 = vsel %vm146, 1, 0
    %v155 = vsel %vm147, 1, 0
    %v156 = vsel %vm148, 1, 0
    %v157 = vsel %vm149, 1, 0
    %v158 = vsel %vm150, 1, 0
    %v159 = vcvt.s32.f32 %v151
    %v160 = vcvt.s32.f32 %v152
    %v161 = vcvt.s32.f32 %v153
    %v162 = vcvt.s32.f32 %v154
    %v163 = vcvt.s32.f32 %v155
    %v164 = vcvt.s32.f32 %v156
    %v165 = vcvt.s32.f32 %v157
    %v166 = vcvt.s32.f32 %v158
    %vm167 = vcmask 523264
    %v169 = vsel %vm167, %v159, 0
    %v172 = vsel %vm167, %v160, 0
    %v175 = vsel %vm167, %v161, 0
    %v178 = vsel %vm167, %v162, 0
    %v181 = vsel %vm167, %v163, 0
    %v184 = vsel %vm167, %v164, 0
    %v187 = vsel %vm167, %v165, 0
    %v190 = vsel %vm167, %v166, 0
    %192 = vmatpush.msra.mxu0 0.0
    %193 = vmatpush.msra.mxu0 0.0
    %194 = vmatpush.msra.mxu0 0.0
    %195 = vmatpush.msra.mxu0 0.0
    %196 = vmatpush.msra.mxu0 0.0
    %197 = vmatpush.msra.mxu0 0.0
    %198 = vmatpush.msra.mxu0 0.0
    %199 = vmatpush.msra.mxu0 0.0
    %200 = vmatpush.msra.mxu0 %v107
    %201 = vmatpush.msra.mxu0 %v104
    %202 = vmatpush.msra.mxu0 %v101
    %203 = vmatpush.msra.mxu0 %v98
    %204 = vmatpush.msra.mxu0 %v95
    %205 = vmatpush.msra.mxu0 %v92
    %206 = vmatpush.msra.mxu0 %v89
    %207 = vmatpush.msra.mxu0 %v86
    %208 = vmatmul.f32.gmra.mxu0 %v169
    %v209 = vpop.f32.mrf.mxu0
    %v210 = vadd.f32 0.0, %v209
    %211 = vmatmul.f32.gmra.mxu0 %v172
    %v212 = vpop.f32.mrf.mxu0
    %v213 = vadd.f32 0.0, %v212
    %214 = vmatmul.f32.gmra.mxu0 %v175
    %v215 = vpop.f32.mrf.mxu0
    %v216 = vadd.f32 0.0, %v215
    %217 = vmatmul.f32.gmra.mxu0 %v178
    %v218 = vpop.f32.mrf.mxu0
    %v219 = vadd.f32 0.0, %v218
    %220 = vmatmul.f32.gmra.mxu0 %v181
    %v221 = vpop.f32.mrf.mxu0
    %v222 = vadd.f32 0.0, %v221
    %223 = vmatmul.f32.gmra.mxu0 %v184
    %v224 = vpop.f32.mrf.mxu0
    %v225 = vadd.f32 0.0, %v224
    %226 = vmatmul.f32.gmra.mxu0 %v187
    %v227 = vpop.f32.mrf.mxu0
    %v228 = vadd.f32 0.0, %v227
    %229 = vmatmul.f32.gmra.mxu0 %v190
    %v230 = vpop.f32.mrf.mxu0
    %v231 = vadd.f32 0.0, %v230
    %232 = vdwg.mxu0
    %v233 = vld [vmem:[%s4] sm:$0xff]
    %v234 = vld [vmem:[%s4 + $0x8] sm:$0xff]
    %v235 = vld [vmem:[%s4 + $0x10] sm:$0xff]
    %v236 = vld [vmem:[%s4 + $0x18] sm:$0xff]
    %v238 = vsel %vm43, 0.0, 0
    %240 = vmatpush.msra.mxu0 0.0
    %241 = vmatpush.msra.mxu0 0.0
    %242 = vmatpush.msra.mxu0 0.0
    %243 = vmatpush.msra.mxu0 0.0
    %244 = vmatpush.msra.mxu0 0.0
    %245 = vmatpush.msra.mxu0 0.0
    %246 = vmatpush.msra.mxu0 0.0
    %247 = vmatpush.msra.mxu0 0.0
    %248 = vmatpush.msra.mxu0 0.0
    %249 = vmatpush.msra.mxu0 0.0
    %250 = vmatpush.msra.mxu0 0.0
    %251 = vmatpush.msra.mxu0 0.0
    %252 = vmatpush.msra.mxu0 %v236
    %253 = vmatpush.msra.mxu0 %v235
    %254 = vmatpush.msra.mxu0 %v234
    %255 = vmatpush.msra.mxu0 %v233
    %256 = vmatmul.f32.gmra.mxu0 %v238
    %v257 = vpop.f32.mrf.mxu0
    %v258 = vadd.f32 0.0, %v257
    %259 = vdwg.mxu0
    %v260 = vadd.f32 %v210, %v258
    %v261 = vtanh.pop %v260
    %v263 = vsel %vm43, %v261, 0
    %265 = vmatpush.msra.mxu0 0.0
    %266 = vmatpush.msra.mxu0 0.0
    %267 = vmatpush.msra.mxu0 0.0
    %268 = vmatpush.msra.mxu0 0.0
    %269 = vmatpush.msra.mxu0 0.0
    %270 = vmatpush.msra.mxu0 0.0
    %271 = vmatpush.msra.mxu0 0.0
    %272 = vmatpush.msra.mxu0 0.0
    %273 = vmatpush.msra.mxu0 0.0
    %274 = vmatpush.msra.mxu0 0.0
    %275 = vmatpush.msra.mxu0 0.0
    %276 = vmatpush.msra.mxu0 0.0
    %277 = vmatpush.msra.mxu0 %v236
    %278 = vmatpush.msra.mxu0 %v235
    %279 = vmatpush.msra.mxu0 %v234
    %280 = vmatpush.msra.mxu0 %v233
    %281 = vmatmul.f32.gmra.mxu0 %v263
    %v282 = vpop.f32.mrf.mxu0
    %v283 = vadd.f32 0.0, %v282
    %284 = vdwg.mxu0
    %v285 = vadd.f32 %v213, %v283
    %v286 = vtanh.pop %v285
    %v288 = vsel %vm43, %v286, 0
    %290 = vmatpush.msra.mxu0 0.0
    %291 = vmatpush.msra.mxu0 0.0
    %292 = vmatpush.msra.mxu0 0.0
    %293 = vmatpush.msra.mxu0 0.0
    %294 = vmatpush.msra.mxu0 0.0
    %295 = vmatpush.msra.mxu0 0.0
    %296 = vmatpush.msra.mxu0 0.0
    %297 = vmatpush.msra.mxu0 0.0
    %298 = vmatpush.msra.mxu0 0.0
    %299 = vmatpush.msra.mxu0 0.0
    %300 = vmatpush.msra.mxu0 0.0
    %301 = vmatpush.msra.mxu0 0.0
    %302 = vmatpush.msra.mxu0 %v236
    %303 = vmatpush.msra.mxu0 %v235
    %304 = vmatpush.msra.mxu0 %v234
    %305 = vmatpush.msra.mxu0 %v233
    %306 = vmatmul.f32.gmra.mxu0 %v288
    %v307 = vpop.f32.mrf.mxu0
    %v308 = vadd.f32 0.0, %v307
    %309 = vdwg.mxu0
    %v310 = vadd.f32 %v216, %v308
    %v311 = vtanh.pop %v310
    %v313 = vsel %vm43, %v311, 0
    %315 = vmatpush.msra.mxu0 0.0
    %316 = vmatpush.msra.mxu0 0.0
    %317 = vmatpush.msra.mxu0 0.0
    %318 = vmatpush.msra.mxu0 0.0
    %319 = vmatpush.msra.mxu0 0.0
    %320 = vmatpush.msra.mxu0 0.0
    %321 = vmatpush.msra.mxu0 0.0
    %322 = vmatpush.msra.mxu0 0.0
    %323 = vmatpush.msra.mxu0 0.0
    %324 = vmatpush.msra.mxu0 0.0
    %325 = vmatpush.msra.mxu0 0.0
    %326 = vmatpush.msra.mxu0 0.0
    %327 = vmatpush.msra.mxu0 %v236
    %328 = vmatpush.msra.mxu0 %v235
    %329 = vmatpush.msra.mxu0 %v234
    %330 = vmatpush.msra.mxu0 %v233
    %331 = vmatmul.f32.gmra.mxu0 %v313
    %v332 = vpop.f32.mrf.mxu0
    %v333 = vadd.f32 0.0, %v332
    %334 = vdwg.mxu0
    %v335 = vadd.f32 %v219, %v333
    %v336 = vtanh.pop %v335
    %v338 = vsel %vm43, %v336, 0
    %340 = vmatpush.msra.mxu0 0.0
    %341 = vmatpush.msra.mxu0 0.0
    %342 = vmatpush.msra.mxu0 0.0
    %343 = vmatpush.msra.mxu0 0.0
    %344 = vmatpush.msra.mxu0 0.0
    %345 = vmatpush.msra.mxu0 0.0
    %346 = vmatpush.msra.mxu0 0.0
    %347 = vmatpush.msra.mxu0 0.0
    %348 = vmatpush.msra.mxu0 0.0
    %349 = vmatpush.msra.mxu0 0.0
    %350 = vmatpush.msra.mxu0 0.0
    %351 = vmatpush.msra.mxu0 0.0
    %352 = vmatpush.msra.mxu0 %v236
    %353 = vmatpush.msra.mxu0 %v235
    %354 = vmatpush.msra.mxu0 %v234
    %355 = vmatpush.msra.mxu0 %v233
    %356 = vmatmul.f32.gmra.mxu0 %v338
    %v357 = vpop.f32.mrf.mxu0
    %v358 = vadd.f32 0.0, %v357
    %359 = vdwg.mxu0
    %v360 = vadd.f32 %v222, %v358
    %v361 = vtanh.pop %v360
    %v363 = vsel %vm43, %v361, 0
    %365 = vmatpush.msra.mxu0 0.0
    %366 = vmatpush.msra.mxu0 0.0
    %367 = vmatpush.msra.mxu0 0.0
    %368 = vmatpush.msra.mxu0 0.0
    %369 = vmatpush.msra.mxu0 0.0
    %370 = vmatpush.msra.mxu0 0.0
    %371 = vmatpush.msra.mxu0 0.0
    %372 = vmatpush.msra.mxu0 0.0
    %373 = vmatpush.msra.mxu0 0.0
    %374 = vmatpush.msra.mxu0 0.0
    %375 = vmatpush.msra.mxu0 0.0
    %376 = vmatpush.msra.mxu0 0.0
    %377 = vmatpush.msra.mxu0 %v236
    %378 = vmatpush.msra.mxu0 %v235
    %379 = vmatpush.msra.mxu0 %v234
    %380 = vmatpush.msra.mxu0 %v233
    %381 = vmatmul.f32.gmra.mxu0 %v363
    %v382 = vpop.f32.mrf.mxu0
    %v383 = vadd.f32 0.0, %v382
    %384 = vdwg.mxu0
    %v385 = vadd.f32 %v225, %v383
    %v386 = vtanh.pop %v385
    %v388 = vsel %vm43, %v386, 0
    %390 = vmatpush.msra.mxu0 0.0
    %391 = vmatpush.msra.mxu0 0.0
    %392 = vmatpush.msra.mxu0 0.0
    %393 = vmatpush.msra.mxu0 0.0
    %394 = vmatpush.msra.mxu0 0.0
    %395 = vmatpush.msra.mxu0 0.0
    %396 = vmatpush.msra.mxu0 0.0
    %397 = vmatpush.msra.mxu0 0.0
    %398 = vmatpush.msra.mxu0 0.0
    %399 = vmatpush.msra.mxu0 0.0
    %400 = vmatpush.msra.mxu0 0.0
    %401 = vmatpush.msra.mxu0 0.0
    %402 = vmatpush.msra.mxu0 %v236
    %403 = vmatpush.msra.mxu0 %v235
    %404 = vmatpush.msra.mxu0 %v234
    %405 = vmatpush.msra.mxu0 %v233
    %406 = vmatmul.f32.gmra.mxu0 %v388
    %v407 = vpop.f32.mrf.mxu0
    %v408 = vadd.f32 0.0, %v407
    %409 = vdwg.mxu0
    %v410 = vadd.f32 %v228, %v408
    %v411 = vtanh.pop %v410
    %v413 = vsel %vm43, %v411, 0
    %415 = vmatpush.msra.mxu0 0.0
    %416 = vmatpush.msra.mxu0 0.0
    %417 = vmatpush.msra.mxu0 0.0
    %418 = vmatpush.msra.mxu0 0.0
    %419 = vmatpush.msra.mxu0 0.0
    %420 = vmatpush.msra.mxu0 0.0
    %421 = vmatpush.msra.mxu0 0.0
    %422 = vmatpush.msra.mxu0 0.0
    %423 = vmatpush.msra.mxu0 0.0
    %424 = vmatpush.msra.mxu0 0.0
    %425 = vmatpush.msra.mxu0 0.0
    %426 = vmatpush.msra.mxu0 0.0
    %427 = vmatpush.msra.mxu0 %v236
    %428 = vmatpush.msra.mxu0 %v235
    %429 = vmatpush.msra.mxu0 %v234
    %430 = vmatpush.msra.mxu0 %v233
    %431 = vmatmul.f32.gmra.mxu0 %v413
    %v432 = vpop.f32.mrf.mxu0
    %v433 = vadd.f32 0.0, %v432
    %434 = vdwg.mxu0
    %v435 = vadd.f32 %v231, %v433
    %v436 = vtanh.pop %v435
    %v437 = vld [vmem:[%s5] sm:$0xff]
    %v438 = vld [vmem:[%s5 + $0x8] sm:$0xff]
    %v439 = vld [vmem:[%s5 + $0x10] sm:$0xff]
    %v440 = vld [vmem:[%s5 + $0x18] sm:$0xff]
    %v441 = vld [vmem:[%s6] sm:$0x1]
    %v443 = vperm.slane %v441, 0
    %v446 = vsel %vm43, %v436, 0
    %448 = vmatpush.msra.mxu0 0.0
    %449 = vmatpush.msra.mxu0 0.0
    %450 = vmatpush.msra.mxu0 0.0
    %451 = vmatpush.msra.mxu0 0.0
    %452 = vmatpush.msra.mxu0 0.0
    %453 = vmatpush.msra.mxu0 0.0
    %454 = vmatpush.msra.mxu0 0.0
    %455 = vmatpush.msra.mxu0 0.0
    %456 = vmatpush.msra.mxu0 0.0
    %457 = vmatpush.msra.mxu0 0.0
    %458 = vmatpush.msra.mxu0 0.0
    %459 = vmatpush.msra.mxu0 0.0
    %460 = vmatpush.msra.mxu0 %v440
    %461 = vmatpush.msra.mxu0 %v439
    %462 = vmatpush.msra.mxu0 %v438
    %463 = vmatpush.msra.mxu0 %v437
    %464 = vmatmul.f32.gmra.mxu0 %v446
    %v465 = vpop.f32.mrf.mxu0
    %v466 = vadd.f32 %v443, %v465
    %467 = vdwg.mxu0
    %vm468 = vcmask 130048
    %469 = vst.msk [vmem:[#allocation2] sm:$0xff] %vm468, %v466
    // Predicated region
    $region30: #{tpu_custom_call.1} parent=1 // pred_check
      _
    $region31: #{tpu_custom_call.1} parent=1 // pred_check_branch
      %471 = sbr.rel (0) target = $region33
    $region32: #{tpu_custom_call.1} parent=1 // pred_region
      %473 = vsyncadd [#allocation3], 0
      %s475 = sshll.u32 [#allocation2], 4
      %s476 = int_to_ptr.vmem [resolvable:$true] %s475
      %s477 = sshll.u32 %s7, 4
      %s478 = int_to_ptr.hbm [resolvable:$true] %s477
      %480 = dma.vmem_to_hbm [thread:$0]  %s476, 128, %s478, [#allocation3]
    $region33: #{tpu_custom_call.1} parent=1 // pred_fallthru
      _
    // Predicated region
    $region34: #{tpu_custom_call.1} parent=1 // pred_check
      _
    $region35: #{tpu_custom_call.1} parent=1 // pred_check_branch
      %482 = sbr.rel (0) target = $region37
    $region36: #{tpu_custom_call.1} parent=1 // pred_region
      %484 = dma.done [#allocation3], 128
    $region37: #{tpu_custom_call.1} parent=1 // pred_fallthru
      _
    %485 = vsyncpa [#allocation3], 1

</llo_original>
